<compile_context>
chip_gen: v6e
topology: v6e:2x2x1
jax: 0.10.0
libtpu: 0.0.40
codegen_flags: <defaults>
</compile_context>

<pallas_src>
import functools
import math

import jax
import jax.numpy as jnp
import numpy as np
from jax.experimental import pallas as pl
from jax.experimental.pallas import tpu as pltpu


DEFAULT_MASK_VALUE = -0.7 * float(np.finfo(np.float32).max)


def _round_up(x, m):
    return ((x + m - 1) // m) * m


# ---------------------------------------------------------------------------
# Tiled GEMM for the projections
# ---------------------------------------------------------------------------
def _linear_kernel(x_ref, w_ref, b_ref, o_ref, acc_ref):
    k = pl.program_id(2)

    @pl.when(k == 0)
    def _():
        acc_ref[...] = jnp.zeros_like(acc_ref)

    acc_ref[...] += jnp.dot(x_ref[...], w_ref[...],
                            preferred_element_type=jnp.float32)

    @pl.when(k == pl.num_programs(2) - 1)
    def _():
        o_ref[...] = (acc_ref[...] + b_ref[...]).astype(o_ref.dtype)


def pallas_linear(x, w, b, *, out_dtype, tm=512, tk=512, tn=512):
    """y = x @ w + b ; x:(M,K), w:(K,N), b:(N,). bf16 MXU, f32 accumulation."""
    M, K = x.shape
    Kw, N = w.shape
    assert K == Kw

    # Pre-cast once (outside the pipelined loop) -> halves x DMA bytes.
    if x.dtype != jnp.bfloat16:
        x = x.astype(jnp.bfloat16)
    if w.dtype != jnp.bfloat16:
        w = w.astype(jnp.bfloat16)

    tm = min(tm, _round_up(M, 8))
    tk = min(tk, _round_up(K, 128))
    tn = min(tn, _round_up(N, 128))
    Mp, Kp, Np = _round_up(M, tm), _round_up(K, tk), _round_up(N, tn)

    if (Mp, Kp) != (M, K):
        x = jnp.pad(x, ((0, Mp - M), (0, Kp - K)))
    if (Kp, Np) != (K, N):
        w = jnp.pad(w, ((0, Kp - K), (0, Np - N)))
    b2 = b.astype(jnp.float32).reshape(1, N)
    if Np != N:
        b2 = jnp.pad(b2, ((0, 0), (0, Np - N)))

    out = pl.pallas_call(
        _linear_kernel,
        out_shape=jax.ShapeDtypeStruct((Mp, Np), out_dtype),
        grid=(Mp // tm, Np // tn, Kp // tk),
        in_specs=[
            pl.BlockSpec((tm, tk), lambda i, j, k: (i, k)),
            pl.BlockSpec((tk, tn), lambda i, j, k: (k, j)),
            pl.BlockSpec((1, tn), lambda i, j, k: (0, j)),
        ],
        out_specs=pl.BlockSpec((tm, tn), lambda i, j, k: (i, j)),
        scratch_shapes=[pltpu.VMEM((tm, tn), jnp.float32)],
        compiler_params=pltpu.CompilerParams(
            dimension_semantics=("parallel", "parallel", "arbitrary"),
            vmem_limit_bytes=48 * 1024 * 1024),
    )(x, w, b2)

    if (Mp, Np) != (M, N):
        out = out[:M, :N]
    return out


# ---------------------------------------------------------------------------
# One-shot rotary-embedding pass: rotate q (scaled by 1/sqrt(D)) and k once.
# ---------------------------------------------------------------------------
def _rope_kernel(q_ref, k_ref, cos_ref, sin_ref, o_ref, *, nhead, head_dim, q_scale):
    half = head_dim // 2
    d_model = nhead * head_dim
    cos = cos_ref[...]                                   # (t, half) f32
    sin = sin_ref[...]
    for src_ref, off, scale in ((q_ref, 0, q_scale), (k_ref, d_model, 1.0)):
        for h in range(nhead):
            base = h * head_dim
            x = src_ref[:, base:base + head_dim].astype(jnp.float32)
            x1, x2 = x[:, :half], x[:, half:]
            r1 = (x1 * cos - x2 * sin) * scale
            r2 = (x2 * cos + x1 * sin) * scale
            o_ref[:, off + base:off + base + half] = r1.astype(o_ref.dtype)
            o_ref[:, off + base + half:off + base + head_dim] = r2.astype(o_ref.dtype)


# ---------------------------------------------------------------------------
# Flash-style multi-head attention with sliding window (window-aware kv grid)
# ---------------------------------------------------------------------------
def _flash_mha_kernel(q_ref, k_ref, v_ref, o_ref, m_ref, l_ref, acc_ref, *,
                      heads_per_blk, head_dim, w0, w1, q_tile, kv_tile,
                      seq_len, n_kv_blocks):
    i = pl.program_id(2)
    j = pl.program_id(3)
    q_start = i * q_tile
    lo_blk = jnp.maximum(q_start - w0, 0) // kv_tile
    hi_blk = jnp.minimum((q_start + q_tile - 1 + w1) // kv_tile, n_kv_blocks - 1)
    kv_blk = jnp.minimum(lo_blk + j, n_kv_blocks - 1)
    k_start = kv_blk * kv_tile

    @pl.when(j == 0)
    def _init():
        m_ref[...] = jnp.full_like(m_ref, -jnp.inf)
        l_ref[...] = jnp.zeros_like(l_ref)
        acc_ref[...] = jnp.zeros_like(acc_ref)

    # Only process kv tiles that can intersect the window (and real sequence).
    active = jnp.logical_and(lo_blk + j <= hi_blk, k_start < seq_len)

    @pl.when(active)
    def _body():
        rows = q_start + jax.lax.broadcasted_iota(jnp.int32, (q_tile, kv_tile), 0)
        cols = k_start + jax.lax.broadcasted_iota(jnp.int32, (q_tile, kv_tile), 1)
        in_window = jnp.logical_and(cols >= rows - w0, cols <= rows + w1)
        in_window = jnp.logical_and(in_window, cols < seq_len)

        for g in range(heads_per_blk):
            sl = slice(g * head_dim, (g + 1) * head_dim)
            s = jax.lax.dot_general(
                q_ref[:, sl], k_ref[:, sl],
                dimension_numbers=(((1,), (1,)), ((), ())),
                preferred_element_type=jnp.float32)          # (q_tile, kv_tile)
            s = jnp.where(in_window, s, DEFAULT_MASK_VALUE)

            m_prev = m_ref[:, g:g + 1]
            l_prev = l_ref[:, g:g + 1]
            m_curr = jnp.max(s, axis=-1, keepdims=True)
            m_next = jnp.maximum(m_prev, m_curr)
            alpha = jnp.exp(m_prev - m_next)
            p = jnp.exp(s - m_next)
            p = jnp.where(in_window, p, 0.0)                 # robust for all-masked rows
            l_ref[:, g:g + 1] = alpha * l_prev + jnp.sum(p, axis=-1, keepdims=True)
            m_ref[:, g:g + 1] = m_next

            pv = jax.lax.dot_general(
                p.astype(jnp.bfloat16), v_ref[:, sl],
                dimension_numbers=(((1,), (0,)), ((), ())),
                preferred_element_type=jnp.float32)          # (q_tile, head_dim)
            acc_ref[:, sl] = alpha * acc_ref[:, sl] + pv

    @pl.when(j == pl.num_programs(3) - 1)
    def _finalize():
        for g in range(heads_per_blk):
            sl = slice(g * head_dim, (g + 1) * head_dim)
            m_g = m_ref[:, g:g + 1]
            l_g = l_ref[:, g:g + 1]
            # Rows that never saw an un-masked key reproduce the reference NaN
            # (softmax over an all -inf row).
            valid = m_g > DEFAULT_MASK_VALUE * 0.5
            inv_l = pl.reciprocal(jnp.where(valid, l_g, 1.0), approx=True)
            out_g = jnp.where(valid, acc_ref[:, sl] * inv_l, jnp.nan)
            o_ref[:, sl] = out_g.astype(o_ref.dtype)


def pallas_mha_attention(qkv, *, nhead, head_dim, window, seq_len,
                         out_dtype=jnp.bfloat16, seq_tile=256):
    """qkv: (N, T, 3*d_model) with feature order [q | k | v], each (head, head_dim)."""
    N, T, F = qkv.shape
    d_model = nhead * head_dim
    assert F == 3 * d_model
    assert d_model % 128 == 0, "d_model must be a multiple of 128 for lane-dense tiling"
    assert head_dim % 2 == 0
    if head_dim >= 128:
        assert head_dim % 128 == 0
        hb = head_dim                        # one head per lane-dense block
    else:
        assert 128 % head_dim == 0
        hb = 128                             # pack 128/head_dim heads per block
    heads_per_blk = hb // head_dim
    n_hg = d_model // hb
    half = head_dim // 2

    tq = min(seq_tile, _round_up(T, 8))
    tkv = tq
    T_pad = _round_up(T, tq)
    if T_pad != T:
        qkv = jnp.pad(qkv, ((0, 0), (0, T_pad - T), (0, 0)))

    # Rotary tables (non-interleaved).
    inv_freq = 1.0 / (10000.0 ** (
        jnp.arange(0, head_dim, 2, dtype=jnp.float32) / head_dim))
    freqs = jnp.outer(jnp.arange(T_pad, dtype=jnp.float32), inv_freq)   # (T_pad, half)
    cos = jnp.cos(freqs)
    sin = jnp.sin(freqs)

    # --- one-shot RoPE pass: q (scaled) and k rotated once, hoisted off the hot loop
    qk_rot = pl.pallas_call(
        functools.partial(_rope_kernel, nhead=nhead, head_dim=head_dim,
                          q_scale=1.0 / math.sqrt(head_dim)),
        out_shape=jax.ShapeDtypeStruct((N, T_pad, 2 * d_model), jnp.bfloat16),
        grid=(N, T_pad // tq),
        in_specs=[
            pl.BlockSpec((None, tq, d_model), lambda b, i: (b, i, 0)),   # q part
            pl.BlockSpec((None, tq, d_model), lambda b, i: (b, i, 1)),   # k part
            pl.BlockSpec((tq, half), lambda b, i: (i, 0)),               # cos
            pl.BlockSpec((tq, half), lambda b, i: (i, 0)),               # sin
        ],
        out_specs=pl.BlockSpec((None, tq, 2 * d_model), lambda b, i: (b, i, 0)),
        compiler_params=pltpu.CompilerParams(
            dimension_semantics=("parallel", "parallel"),
            vmem_limit_bytes=48 * 1024 * 1024),
    )(qkv, qkv, cos, sin)

    # --- window-aware kv grid extent (static)
    w0, w1 = int(window[0]), int(window[1])
    n_kv_total = T_pad // tkv
    n_q = T_pad // tq
    span = 1
    for qi in range(n_q):
        qs = qi * tq
        lo = max(qs - w0, 0) // tkv
        hi = min((qs + tq - 1 + w1) // tkv, n_kv_total - 1)
        span = max(span, hi - lo + 1)
    n_kv_steps = max(1, span)

    def kv_block_index(i, j):
        lo = jnp.maximum(i * tq - w0, 0) // tkv
        return jnp.minimum(lo + j, n_kv_total - 1)

    kernel = functools.partial(
        _flash_mha_kernel, heads_per_blk=heads_per_blk, head_dim=head_dim,
        w0=w0, w1=w1, q_tile=tq, kv_tile=tkv, seq_len=int(seq_len),
        n_kv_blocks=n_kv_total)

    out = pl.pallas_call(
        kernel,
        out_shape=jax.ShapeDtypeStruct((N, T_pad, d_model), out_dtype),
        grid=(N, n_hg, n_q, n_kv_steps),
        in_specs=[
            # q  (rotated, pre-scaled)
            pl.BlockSpec((None, tq, hb), lambda b, h, i, j: (b, i, h)),
            # k  (rotated)
            pl.BlockSpec((None, tkv, hb),
                         lambda b, h, i, j: (b, kv_block_index(i, j), n_hg + h)),
            # v  (straight from the fused qkv activation)
            pl.BlockSpec((None, tkv, hb),
                         lambda b, h, i, j: (b, kv_block_index(i, j), 2 * n_hg + h)),
        ],
        out_specs=pl.BlockSpec((None, tq, hb), lambda b, h, i, j: (b, i, h)),
        scratch_shapes=[
            pltpu.VMEM((tq, heads_per_blk), jnp.float32),   # running max   m
            pltpu.VMEM((tq, heads_per_blk), jnp.float32),   # running denom l
            pltpu.VMEM((tq, hb), jnp.float32),              # output accumulator
        ],
        compiler_params=pltpu.CompilerParams(
            dimension_semantics=("parallel", "parallel", "parallel", "arbitrary"),
            vmem_limit_bytes=48 * 1024 * 1024),
    )(qk_rot, qk_rot, qkv)

    return out[:, :T, :] if T_pad != T else out


# ---------------------------------------------------------------------------
# Module wrapper
# ---------------------------------------------------------------------------
class MultiHeadAttentionPallas:
    def __init__(self, d_model, nhead, key, qkv_bias=False, out_bias=True,
                 rotary_dim=None, attn_window=None, seq_tile=256):
        assert d_model % nhead == 0, "d_model must be divisible by nhead"
        self.d_model = d_model
        self.nhead = nhead
        self.head_dim = d_model // nhead
        assert self.head_dim % 2 == 0
        self.rotary_dim = self.head_dim if rotary_dim is None else rotary_dim
        # TODO(synk): partial rotary (rotary_dim < head_dim) not implemented; default path only.
        assert self.rotary_dim == self.head_dim
        self.attn_window = (-1, -1) if attn_window is None else tuple(attn_window)
        self.seq_tile = seq_tile

        k1, k2, k3, k4 = jax.random.split(key, 4)
        s = 0.02
        # Weights stored as (in, out) so the kernels compute x @ W + b (== torch Linear);
        # kept in bf16 (MXU-native), biases in f32.
        self.w_qkv = (jax.random.normal(k1, (d_model, 3 * d_model), jnp.float32) * s
                      ).astype(jnp.bfloat16)
        self.b_qkv = (jax.random.normal(k2, (3 * d_model,), jnp.float32) * s
                      if qkv_bias else jnp.zeros((3 * d_model,), jnp.float32))
        self.w_out = (jax.random.normal(k3, (d_model, d_model), jnp.float32) * s
                      ).astype(jnp.bfloat16)
        self.b_out = (jax.random.normal(k4, (d_model,), jnp.float32) * s
                      if out_bias else jnp.zeros((d_model,), jnp.float32))

    def __call__(self, x):
        N, T, _ = x.shape
        qkv = pallas_linear(x.reshape(N * T, self.d_model), self.w_qkv, self.b_qkv,
                            out_dtype=jnp.bfloat16)
        qkv = qkv.reshape(N, T, 3 * self.d_model)            # free reshape, no transpose
        attn = pallas_mha_attention(
            qkv, nhead=self.nhead, head_dim=self.head_dim,
            window=self.attn_window, seq_len=T,
            out_dtype=jnp.bfloat16, seq_tile=self.seq_tile)   # (N, T, d_model)
        out = pallas_linear(attn.reshape(N * T, self.d_model), self.w_out, self.b_out,
                            out_dtype=jnp.float32)
        return out.reshape(N, T, self.d_model)


# ---------------------------------------------------------------------------
# Pure-JAX reference (mirrors the PyTorch module) for a sanity check
# ---------------------------------------------------------------------------
def reference_forward(x, mha):
    f32 = jnp.float32
    N, T, _ = x.shape
    H, D = mha.nhead, mha.head_dim
    qkv = x.reshape(N * T, -1) @ mha.w_qkv.astype(f32) + mha.b_qkv
    qkv = qkv.reshape(N, T, 3, H, D)
    q, k, v = qkv[:, :, 0], qkv[:, :, 1], qkv[:, :, 2]          # (N, T, H, D)

    inv_freq = 1.0 / (10000.0 ** (jnp.arange(0, D, 2, dtype=f32) / D))
    freqs = jnp.outer(jnp.arange(T, dtype=f32), inv_freq)
    cos = jnp.cos(freqs)[None, :, None, :]
    sin = jnp.sin(freqs)[None, :, None, :]

    def rope(t):
        t1, t2 = t[..., :D // 2], t[..., D // 2:]
        return jnp.concatenate([t1 * cos - t2 * sin, t2 * cos + t1 * sin], axis=-1)

    q, k = rope(q), rope(k)
    s = jnp.einsum('nthd,nshd->nhts', q, k) / math.sqrt(D)
    i = jnp.arange(T)[:, None]
    j = jnp.arange(T)[None, :]
    w0, w1 = mha.attn_window
    mask = (j >= i - w0) & (j <= i + w1)
    s = jnp.where(mask, s, -jnp.inf)
    p = jax.nn.softmax(s, axis=-1)
    o = jnp.einsum('nhts,nshd->nthd', p, v).reshape(N, T, H * D)
    out = o.reshape(N * T, -1) @ mha.w_out.astype(f32) + mha.b_out
    return out.reshape(N, T, -1)


# ---------------------------------------------------------------------------
if __name__ == "__main__":
    key = jax.random.PRNGKey(0)
    kx, kp = jax.random.split(key)

    N, T, d_model, nhead = 2, 8, 128, 4
    x = jax.random.normal(kx, (N, T, d_model), jnp.float32)

    # attn_window=(4, 4): a real sliding window (the module default (-1, -1) masks
    # every position and yields NaN rows in the PyTorch reference as well).
    mha = MultiHeadAttentionPallas(d_model, nhead, kp, attn_window=(4, 4))

    out = mha(x)
    jax.block_until_ready(out)
    assert out.shape == (N, T, d_model)
    assert bool(jnp.all(jnp.isfinite(out)))

    ref = reference_forward(x, mha)
    err = float(jnp.max(jnp.abs(out - ref)))
    assert err < 3e-2, f"mismatch vs reference: max abs err = {err}"
    print("KERNEL_OK")
</pallas_src>

<mosaic_0001>
module attributes {stable_mosaic.version = 11 : i64} {
  func.func @_linear_kernel(%arg0: i32, %arg1: i32, %arg2: i32, %arg3: memref<16x128xbf16, #tpu.memory_space<vmem>>, %arg4: memref<128x384xbf16, #tpu.memory_space<vmem>>, %arg5: memref<1x384xf32, #tpu.memory_space<vmem>>, %arg6: memref<16x384xbf16, #tpu.memory_space<vmem>>, %arg7: memref<16x384xf32, #tpu.memory_space<vmem>>) attributes {dimension_semantics = [#tpu.dimension_semantics<parallel>, #tpu.dimension_semantics<parallel>, #tpu.dimension_semantics<arbitrary>], iteration_bounds = array<i64: 1, 1, 1>, scalar_prefetch = 0 : i64, scratch_operands = 1 : i64, tpu.core_type = #tpu.core_type<tc>, window_params = [{transform_indices = @transform_0, window_bounds = array<i64: 16, 128>}, {transform_indices = @transform_1, window_bounds = array<i64: 128, 384>}, {transform_indices = @transform_2, window_bounds = array<i64: 1, 384>}, {transform_indices = @transform_3, window_bounds = array<i64: 16, 384>}]} {
    %c0_i32 = arith.constant 0 : i32
    %0 = arith.cmpi eq, %arg2, %c0_i32 : i32
    %1 = arith.extui %0 : i1 to i32
    %c0_i32_0 = arith.constant 0 : i32
    %2 = arith.cmpi ne, %1, %c0_i32_0 : i32
    scf.if %2 {
      %cst_10 = arith.constant 0.000000e+00 : f32
      %12 = vector.broadcast %cst_10 : f32 to vector<16x384xf32>
      %c0_11 = arith.constant 0 : index
      %c0_12 = arith.constant 0 : index
      %13 = vector.load %arg7[%c0_11, %c0_12] : memref<16x384xf32, #tpu.memory_space<vmem>>, vector<16x384xf32>
      tpu.vector_store %arg7[%c0_11, %c0_12], %12 {strides = array<i32>} : memref<16x384xf32, #tpu.memory_space<vmem>>, vector<16x384xf32>,
    } else {
    }
    %c0 = arith.constant 0 : index
    %c0_1 = arith.constant 0 : index
    %3 = vector.load %arg7[%c0, %c0_1] : memref<16x384xf32, #tpu.memory_space<vmem>>, vector<16x384xf32>
    %c0_2 = arith.constant 0 : index
    %c0_3 = arith.constant 0 : index
    %4 = vector.load %arg3[%c0_2, %c0_3] : memref<16x128xbf16, #tpu.memory_space<vmem>>, vector<16x128xbf16>
    %c0_4 = arith.constant 0 : index
    %c0_5 = arith.constant 0 : index
    %5 = vector.load %arg4[%c0_4, %c0_5] : memref<128x384xbf16, #tpu.memory_space<vmem>>, vector<128x384xbf16>
    %cst = arith.constant dense<0.000000e+00> : vector<16x384xf32>
    %6 = tpu.matmul %4, %5, %cst {dimension_numbers = #tpu.dot_dimension_numbers<[1], [0], [0], [1], [0, 0, 1, 1], [], []>} : vector<16x128xbf16>, vector<128x384xbf16>, vector<16x384xf32> -> vector<16x384xf32>
    %7 = arith.addf %3, %6 : vector<16x384xf32>
    %c0_6 = arith.constant 0 : index
    %c0_7 = arith.constant 0 : index
    %8 = vector.load %arg7[%c0_6, %c0_7] : memref<16x384xf32, #tpu.memory_space<vmem>>, vector<16x384xf32>
    tpu.vector_store %arg7[%c0_6, %c0_7], %7 {strides = array<i32>} : memref<16x384xf32, #tpu.memory_space<vmem>>, vector<16x384xf32>,
    %c0_i32_8 = arith.constant 0 : i32
    %9 = arith.cmpi eq, %arg2, %c0_i32_8 : i32
    %10 = arith.extui %9 : i1 to i32
    %c0_i32_9 = arith.constant 0 : i32
    %11 = arith.cmpi ne, %10, %c0_i32_9 : i32
    scf.if %11 {
      %c0_10 = arith.constant 0 : index
      %c0_11 = arith.constant 0 : index
      %12 = vector.load %arg7[%c0_10, %c0_11] : memref<16x384xf32, #tpu.memory_space<vmem>>, vector<16x384xf32>
      %c0_12 = arith.constant 0 : index
      %c0_13 = arith.constant 0 : index
      %13 = vector.load %arg5[%c0_12, %c0_13] : memref<1x384xf32, #tpu.memory_space<vmem>>, vector<1x384xf32>
      %14 = vector.broadcast %13 : vector<1x384xf32> to vector<16x384xf32>
      %15 = arith.addf %12, %14 : vector<16x384xf32>
      %16 = arith.truncf %15 : vector<16x384xf32> to vector<16x384xbf16>
      %c0_14 = arith.constant 0 : index
      %c0_15 = arith.constant 0 : index
      %17 = vector.load %arg6[%c0_14, %c0_15] : memref<16x384xbf16, #tpu.memory_space<vmem>>, vector<16x384xbf16>
      tpu.vector_store %arg6[%c0_14, %c0_15], %16 {strides = array<i32>} : memref<16x384xbf16, #tpu.memory_space<vmem>>, vector<16x384xbf16>,
    } else {
    }
    return
  }
  func.func @transform_0(%arg0: i32, %arg1: i32, %arg2: i32) -> (i32, i32) {
    %c0_i32 = arith.constant 0 : i32
    return %arg0, %arg2 : i32, i32
  }
  func.func @transform_1(%arg0: i32, %arg1: i32, %arg2: i32) -> (i32, i32) {
    %c0_i32 = arith.constant 0 : i32
    return %arg2, %arg1 : i32, i32
  }
  func.func @transform_2(%arg0: i32, %arg1: i32, %arg2: i32) -> (i32, i32) {
    %c0_i32 = arith.constant 0 : i32
    %c0_i32_0 = arith.constant 0 : i32
    return %c0_i32, %arg1 : i32, i32
  }
  func.func @transform_3(%arg0: i32, %arg1: i32, %arg2: i32) -> (i32, i32) {
    %c0_i32 = arith.constant 0 : i32
    return %arg0, %arg1 : i32, i32
  }
}

</mosaic_0001>

<llo_original>
// kernel: tpu_custom_call.1
$region0: #{tpu_custom_call.1}
  #allocation0 [shape = 'u32[]', space=smem, size = 0x4, offset = 0x4, fixed_abs, tag = 'smem constant byte address 0x4 - core index']
  #allocation1 [shape = 'u32[144,128]{1,0:T(1,128)}', space=vmem, size = 0x12000, scoped, tag = 'internal scratch']
  #allocation2 [shape = 'f32[16,384]{1,0:T(8,128)}', space=vmem, size = 0x6000, scoped, tag = 'scratch operand']
  %s0 = inlined_call_operand.hbm [shape: bf16[16,128], index: 0, kind: input, shape index: {}]
  %s1 = inlined_call_operand.hbm [shape: bf16[128,384], index: 1, kind: input, shape index: {}]
  %s2 = inlined_call_operand.vmem [shape: f32[1,384], index: 2, kind: input, shape index: {}]
  %s3 = inlined_call_operand.hbm [shape: bf16[16,384], index: 3, kind: output, shape index: {}]
  %s4 = sld [smem:[#allocation0]]
  $region38: #{tpu_custom_call.1} parent=0
    _
  %s6 = ssub.s32 1, %s4
  %s7 = scalar_select 0, %s6, %s4
  $region1: #{tpu_custom_call.1} parent=0
    #allocation3 [shape = 'u8[4096]{0}', space=vmem, size = 0x1000, scoped, tag = 'input window, operand 0, single buffered']
    #allocation4 [shape = 's32[1]{0}', space=sflag, size = 0x4, scoped, tag = 'scoped memory for tpu_custom_call.1']
    #allocation5 [shape = 's32[1]{0}', space=sflag, size = 0x4, scoped, tag = 'scoped memory for tpu_custom_call.1']
    #allocation6 [shape = 'u8[98304]{0}', space=vmem, size = 0x18000, scoped, tag = 'input window, operand 1, single buffered']
    #allocation7 [shape = 's32[1]{0}', space=sflag, size = 0x4, scoped, tag = 'scoped memory for tpu_custom_call.1']
    #allocation8 [shape = 'u8[12288]{0}', space=vmem, size = 0x3000, scoped, tag = 'output window, operand 0, single buffered']
    %8 = vsyncpa [#allocation4], 0
    %9 = vsyncpa [#allocation7], 0
    %10 = vsyncpa [#allocation5], 0
    // Predicated region
    $region2: #{tpu_custom_call.1} parent=1 // pred_check
      _
    $region3: #{tpu_custom_call.1} parent=1 // pred_check_branch
      %12 = sbr.rel (0) target = $region5
    $region4: #{tpu_custom_call.1} parent=1 // pred_region
      %s14 = ssub.s32 128, 128
      %15 = vsyncadd [#allocation4], %s14
      %s16 = sshll.u32 [#allocation3], 4
      %s17 = int_to_ptr.vmem [resolvable:$true] %s16
      %22 = dma.hbm_to_vmem [thread:$0]  %s0, 128, %s17, [#allocation4], 64, 64, 4
    $region5: #{tpu_custom_call.1} parent=1 // pred_fallthru
      _
    // Predicated region
    $region6: #{tpu_custom_call.1} parent=1 // pred_check
      _
    $region7: #{tpu_custom_call.1} parent=1 // pred_check_branch
      %24 = sbr.rel (0) target = $region9
    $region8: #{tpu_custom_call.1} parent=1 // pred_region
      %s26 = ssub.s32 3072, 3072
      %27 = vsyncadd [#allocation7], %s26
      %s28 = sshll.u32 [#allocation6], 4
      %s29 = int_to_ptr.vmem [resolvable:$true] %s28
      %34 = dma.hbm_to_vmem [thread:$0]  %s1, 3072, %s29, [#allocation7], 192, 192, 12
    $region9: #{tpu_custom_call.1} parent=1 // pred_fallthru
      _
    // Predicated region
    $region10: #{tpu_custom_call.1} parent=1 // pred_check
      _
    $region11: #{tpu_custom_call.1} parent=1 // pred_check_branch
      %36 = sbr.rel (0) target = $region13
    $region12: #{tpu_custom_call.1} parent=1 // pred_region
      _
    $region13: #{tpu_custom_call.1} parent=1 // pred_fallthru
      _
    // Predicated region
    $region14: #{tpu_custom_call.1} parent=1 // pred_check
      _
    $region15: #{tpu_custom_call.1} parent=1 // pred_check_branch
      %38 = sbr.rel (0) target = $region17
    $region16: #{tpu_custom_call.1} parent=1 // pred_region
      %39 = dma.done [#allocation4], 128
    $region17: #{tpu_custom_call.1} parent=1 // pred_fallthru
      _
    // Predicated region
    $region18: #{tpu_custom_call.1} parent=1 // pred_check
      _
    $region19: #{tpu_custom_call.1} parent=1 // pred_check_branch
      %41 = sbr.rel (0) target = $region21
    $region20: #{tpu_custom_call.1} parent=1 // pred_region
      %42 = dma.done [#allocation7], 3072
    $region21: #{tpu_custom_call.1} parent=1 // pred_fallthru
      _
    %p44 = scmp.eq.s32.totalorder 0, 0
    // Predicated region
    $region22: #{tpu_custom_call.1} parent=1 // pred_check
      %p45 = pneg %p44
    $region23: #{tpu_custom_call.1} parent=1 // pred_check_branch
      %47 = sbr.rel (%p45) target = $region25
    $region24: #{tpu_custom_call.1} parent=1 // pred_region
      %48 = vst [vmem:[#allocation2] sm:$0xff] 0.0
      %49 = vst [vmem:[#allocation2 + $0x8] sm:$0xff] 0.0
      %50 = vst [vmem:[#allocation2 + $0x10] sm:$0xff] 0.0
      %51 = vst [vmem:[#allocation2 + $0x18] sm:$0xff] 0.0
      %52 = vst [vmem:[#allocation2 + $0x20] sm:$0xff] 0.0
      %53 = vst [vmem:[#allocation2 + $0x28] sm:$0xff] 0.0
    $region25: #{tpu_custom_call.1} parent=1 // pred_fallthru
      _
    %v54 = vld [vmem:[#allocation2] sm:$0xff]
    %v55 = vld [vmem:[#allocation2 + $0x8] sm:$0xff]
    %v56 = vld [vmem:[#allocation2 + $0x10] sm:$0xff]
    %v57 = vld [vmem:[#allocation2 + $0x18] sm:$0xff]
    %v58 = vld [vmem:[#allocation2 + $0x20] sm:$0xff]
    %v59 = vld [vmem:[#allocation2 + $0x28] sm:$0xff]
    %v60 = vld [vmem:[#allocation3] sm:$0xf]
    %v61 = vld [vmem:[#allocation3 + $0x4] sm:$0xf]
    %v62 = vld [vmem:[#allocation6] sm:$0xff]
    %v63 = vld [vmem:[#allocation6 + $0x8] sm:$0xf]
    %v64 = vld [vmem:[#allocation6 + $0xc] sm:$0xff]
    %v65 = vld [vmem:[#allocation6 + $0x14] sm:$0xf]
    %v66 = vld [vmem:[#allocation6 + $0x18] sm:$0xff]
    %v67 = vld [vmem:[#allocation6 + $0x20] sm:$0xf]
    %v68 = vld [vmem:[#allocation6 + $0x24] sm:$0xff]
    %v69 = vld [vmem:[#allocation6 + $0x2c] sm:$0xf]
    %v70 = vld [vmem:[#allocation6 + $0x30] sm:$0xff]
    %v71 = vld [vmem:[#allocation6 + $0x38] sm:$0xf]
    %v72 = vld [vmem:[#allocation6 + $0x3c] sm:$0xff]
    %v73 = vld [vmem:[#allocation6 + $0x44] sm:$0xf]
    %v74 = vld [vmem:[#allocation6 + $0x48] sm:$0xff]
    %v75 = vld [vmem:[#allocation6 + $0x50] sm:$0xf]
    %v76 = vld [vmem:[#allocation6 + $0x54] sm:$0xff]
    %v77 = vld [vmem:[#allocation6 + $0x5c] sm:$0xf]
    %v78 = vld [vmem:[#allocation6 + $0x60] sm:$0xff]
    %v79 = vld [vmem:[#allocation6 + $0x68] sm:$0xf]
    %v80 = vld [vmem:[#allocation6 + $0x6c] sm:$0xff]
    %v81 = vld [vmem:[#allocation6 + $0x74] sm:$0xf]
    %v82 = vld [vmem:[#allocation6 + $0x78] sm:$0xff]
    %v83 = vld [vmem:[#allocation6 + $0x80] sm:$0xf]
    %v84 = vld [vmem:[#allocation6 + $0x84] sm:$0xff]
    %v85 = vld [vmem:[#allocation6 + $0x8c] sm:$0xf]
    %v86 = vld [vmem:[#allocation6 + $0x90] sm:$0xff]
    %v87 = vld [vmem:[#allocation6 + $0x98] sm:$0xf]
    %v88 = vld [vmem:[#allocation6 + $0x9c] sm:$0xff]
    %v89 = vld [vmem:[#allocation6 + $0xa4] sm:$0xf]
    %v90 = vld [vmem:[#allocation6 + $0xa8] sm:$0xff]
    %v91 = vld [vmem:[#allocation6 + $0xb0] sm:$0xf]
    %v92 = vld [vmem:[#allocation6 + $0xb4] sm:$0xff]
    %v93 = vld [vmem:[#allocation6 + $0xbc] sm:$0xf]
    %v96 = vunpack.c.l.b16 %v60
    %v97 = vunpack.c.l.b16 %v61
    %v98 = vpack.c.b16 %v97, %v96
    %v132 = vunpack.c.l.b16 %v62
    %v133 = vunpack.c.h.b16 %v62
    %v134 = vunpack.c.l.b16 %v63
    %v135 = vunpack.c.l.b16 %v64
    %v136 = vunpack.c.h.b16 %v64
    %v137 = vunpack.c.l.b16 %v65
    %v138 = vunpack.c.l.b16 %v66
    %v139 = vunpack.c.h.b16 %v66
    %v140 = vunpack.c.l.b16 %v67
    %v141 = vunpack.c.l.b16 %v68
    %v142 = vunpack.c.h.b16 %v68
    %v143 = vunpack.c.l.b16 %v69
    %v144 = vunpack.c.l.b16 %v70
    %v145 = vunpack.c.h.b16 %v70
    %v146 = vunpack.c.l.b16 %v71
    %v147 = vunpack.c.l.b16 %v72
    %v148 = vunpack.c.h.b16 %v72
    %v149 = vunpack.c.l.b16 %v73
    %v150 = vunpack.c.l.b16 %v74
    %v151 = vunpack.c.h.b16 %v74
    %v152 = vunpack.c.l.b16 %v75
    %v153 = vunpack.c.l.b16 %v76
    %v154 = vunpack.c.h.b16 %v76
    %v155 = vunpack.c.l.b16 %v77
    %v156 = vunpack.c.l.b16 %v78
    %v157 = vunpack.c.h.b16 %v78
    %v158 = vunpack.c.l.b16 %v79
    %v159 = vunpack.c.l.b16 %v80
    %v160 = vunpack.c.h.b16 %v80
    %v161 = vunpack.c.l.b16 %v81
    %v162 = vunpack.c.l.b16 %v82
    %v163 = vunpack.c.h.b16 %v82
    %v164 = vunpack.c.l.b16 %v83
    %v165 = vunpack.c.l.b16 %v84
    %v166 = vunpack.c.h.b16 %v84
    %v167 = vunpack.c.l.b16 %v85
    %v168 = vunpack.c.l.b16 %v86
    %v169 = vunpack.c.h.b16 %v86
    %v170 = vunpack.c.l.b16 %v87
    %v171 = vunpack.c.l.b16 %v88
    %v172 = vunpack.c.h.b16 %v88
    %v173 = vunpack.c.l.b16 %v89
    %v174 = vunpack.c.l.b16 %v90
    %v175 = vunpack.c.h.b16 %v90
    %v176 = vunpack.c.l.b16 %v91
    %v177 = vunpack.c.l.b16 %v92
    %v178 = vunpack.c.h.b16 %v92
    %v179 = vunpack.c.l.b16 %v93
    %v180 = vpack.c.b16 %v135, %v132
    %v181 = vpack.c.b16 %v136, %v133
    %v182 = vpack.c.b16 %v137, %v134
    %v183 = vpack.c.b16 %v141, %v138
    %v184 = vpack.c.b16 %v142, %v139
    %v185 = vpack.c.b16 %v143, %v140
    %v186 = vpack.c.b16 %v147, %v144
    %v187 = vpack.c.b16 %v148, %v145
    %v188 = vpack.c.b16 %v149, %v146
    %v189 = vpack.c.b16 %v153, %v150
    %v190 = vpack.c.b16 %v154, %v151
    %v191 = vpack.c.b16 %v155, %v152
    %v192 = vpack.c.b16 %v159, %v156
    %v193 = vpack.c.b16 %v160, %v157
    %v194 = vpack.c.b16 %v161, %v158
    %v195 = vpack.c.b16 %v165, %v162
    %v196 = vpack.c.b16 %v166, %v163
    %v197 = vpack.c.b16 %v167, %v164
    %v198 = vpack.c.b16 %v171, %v168
    %v199 = vpack.c.b16 %v172, %v169
    %v200 = vpack.c.b16 %v173, %v170
    %v201 = vpack.c.b16 %v177, %v174
    %v202 = vpack.c.b16 %v178, %v175
    %v203 = vpack.c.b16 %v179, %v176
    %228 = vmatprep.subr.bf16.mxu0 %v202
    %229 = vmatpush1.bf16.msra.mxu0 %v201
    %230 = vmatprep.subr.bf16.mxu0 %v199
    %231 = vmatpush1.bf16.msra.mxu0 %v198
    %232 = vmatprep.subr.bf16.mxu0 %v196
    %233 = vmatpush1.bf16.msra.mxu0 %v195
    %234 = vmatprep.subr.bf16.mxu0 %v193
    %235 = vmatpush1.bf16.msra.mxu0 %v192
    %236 = vmatprep.subr.bf16.mxu0 %v190
    %237 = vmatpush1.bf16.msra.mxu0 %v189
    %238 = vmatprep.subr.bf16.mxu0 %v187
    %239 = vmatpush1.bf16.msra.mxu0 %v186
    %240 = vmatprep.subr.bf16.mxu0 %v184
    %241 = vmatpush1.bf16.msra.mxu0 %v183
    %242 = vmatprep.subr.bf16.mxu0 %v181
    %243 = vmatpush1.bf16.msra.mxu0 %v180
    %244 = vmatprep.subr.bf16.mxu0 0
    %245 = vmatpush2.bf16.msra.mxu0 0
    %246 = vmatprep.subr.bf16.mxu0 0
    %247 = vmatpush2.bf16.msra.mxu0 0
    %248 = vmatprep.subr.bf16.mxu0 0
    %249 = vmatpush2.bf16.msra.mxu0 0
    %250 = vmatprep.subr.bf16.mxu0 0
    %251 = vmatpush2.bf16.msra.mxu0 0
    %252 = vmatprep.subr.bf16.mxu0 0
    %253 = vmatpush2.bf16.msra.mxu0 0
    %254 = vmatprep.subr.bf16.mxu0 0
    %255 = vmatpush2.bf16.msra.mxu0 0
    %256 = vmatprep.subr.bf16.mxu0 0
    %257 = vmatpush2.bf16.msra.mxu0 0
    %258 = vmatprep.subr.bf16.mxu0 0
    %259 = vmatpush2.bf16.msra.mxu0 0
    %260 = vmatprep.mubr.bf16.mxu0 0
    %261 = vmatmul.mubr.bf16.gmra.mxu0 %v98
    %v262 = vpop.f32.mrf.mxu0
    %v263 = vadd.f32 0.0, %v262
    %v264 = vpop.f32.mrf.mxu0
    %v265 = vadd.f32 0.0, %v264
    %v266 = vpop.f32.mrf.mxu0
    %v267 = vadd.f32 0.0, %v266
    %v268 = vpop.f32.mrf.mxu0
    %v269 = vadd.f32 0.0, %v268
    %270 = vdwg.mxu0
    %271 = vmatprep.subr.bf16.mxu0 0
    %272 = vmatpush1.bf16.msra.mxu0 %v203
    %273 = vmatprep.subr.bf16.mxu0 0
    %274 = vmatpush1.bf16.msra.mxu0 %v200
    %275 = vmatprep.subr.bf16.mxu0 0
    %276 = vmatpush1.bf16.msra.mxu0 %v197
    %277 = vmatprep.subr.bf16.mxu0 0
    %278 = vmatpush1.bf16.msra.mxu0 %v194
    %279 = vmatprep.subr.bf16.mxu0 0
    %280 = vmatpush1.bf16.msra.mxu0 %v191
    %281 = vmatprep.subr.bf16.mxu0 0
    %282 = vmatpush1.bf16.msra.mxu0 %v188
    %283 = vmatprep.subr.bf16.mxu0 0
    %284 = vmatpush1.bf16.msra.mxu0 %v185
    %285 = vmatprep.subr.bf16.mxu0 0
    %286 = vmatpush1.bf16.msra.mxu0 %v182
    %287 = vmatprep.subr.bf16.mxu0 0
    %288 = vmatpush2.bf16.msra.mxu0 0
    %289 = vmatprep.subr.bf16.mxu0 0
    %290 = vmatpush2.bf16.msra.mxu0 0
    %291 = vmatprep.subr.bf16.mxu0 0
    %292 = vmatpush2.bf16.msra.mxu0 0
    %293 = vmatprep.subr.bf16.mxu0 0
    %294 = vmatpush2.bf16.msra.mxu0 0
    %295 = vmatprep.subr.bf16.mxu0 0
    %296 = vmatpush2.bf16.msra.mxu0 0
    %297 = vmatprep.subr.bf16.mxu0 0
    %298 = vmatpush2.bf16.msra.mxu0 0
    %299 = vmatprep.subr.bf16.mxu0 0
    %300 = vmatpush2.bf16.msra.mxu0 0
    %301 = vmatprep.subr.bf16.mxu0 0
    %302 = vmatpush2.bf16.msra.mxu0 0
    %303 = vmatprep.mubr.bf16.mxu0 0
    %304 = vmatmul.mubr.bf16.gmra.mxu0 %v98
    %v305 = vpop.f32.mrf.mxu0
    %v306 = vadd.f32 0.0, %v305
    %v307 = vpop.f32.mrf.mxu0
    %v308 = vpop.f32.mrf.mxu0
    %v309 = vadd.f32 0.0, %v308
    %v310 = vpop.f32.mrf.mxu0
    %311 = vdwg.mxu0
    %v312 = vadd.f32 %v54, %v263
    %v313 = vadd.f32 %v55, %v265
    %v314 = vadd.f32 %v56, %v306
    %v315 = vadd.f32 %v57, %v267
    %v316 = vadd.f32 %v58, %v269
    %v317 = vadd.f32 %v59, %v309
    %318 = vst [vmem:[#allocation2] sm:$0xff] %v312
    %319 = vst [vmem:[#allocation2 + $0x8] sm:$0xff] %v313
    %320 = vst [vmem:[#allocation2 + $0x10] sm:$0xff] %v314
    %321 = vst [vmem:[#allocation2 + $0x18] sm:$0xff] %v315
    %322 = vst [vmem:[#allocation2 + $0x20] sm:$0xff] %v316
    %323 = vst [vmem:[#allocation2 + $0x28] sm:$0xff] %v317
    // Predicated region
    $region26: #{tpu_custom_call.1} parent=1 // pred_check
      %p324 = pneg %p44
    $region27: #{tpu_custom_call.1} parent=1 // pred_check_branch
      %326 = sbr.rel (%p324) target = $region29
    $region28: #{tpu_custom_call.1} parent=1 // pred_region
      %v327 = vld [vmem:[#allocation2] sm:$0xff]
      %v328 = vld [vmem:[#allocation2 + $0x8] sm:$0xff]
      %v329 = vld [vmem:[#allocation2 + $0x10] sm:$0xff]
      %v330 = vld [vmem:[#allocation2 + $0x18] sm:$0xff]
      %v331 = vld [vmem:[#allocation2 + $0x20] sm:$0xff]
      %v332 = vld [vmem:[#allocation2 + $0x28] sm:$0xff]
      %v333 = vld [vmem:[%s2] sm:$0x7]
      %v335 = vlaneseq
      %v336 = vshrl.u32 %v335, 7
      %v337 = vsub.s32 0, %v336
      %v338 = vrot.slane %v333, %v337
      %v339 = vlaneseq
      %v340 = vshrl.u32 %v339, 7
      %v341 = vsub.s32 1, %v340
      %v342 = vrot.slane %v333, %v341
      %v343 = vlaneseq
      %v344 = vshrl.u32 %v343, 7
      %v345 = vsub.s32 2, %v344
      %v346 = vrot.slane %v333, %v345
      %v350 = vadd.f32 %v327, %v338
      %v351 = vadd.f32 %v328, %v342
      %v352 = vadd.f32 %v329, %v346
      %v353 = vadd.f32 %v330, %v338
      %v354 = vadd.f32 %v331, %v342
      %v355 = vadd.f32 %v332, %v346
      %v356 = vpack.c.bf16 %v353, %v350
      %v357 = vpack.c.bf16 %v354, %v351
      %v358 = vpack.c.bf16 %v355, %v352
      %v362 = vunpack.c.l.b16 %v356
      %v363 = vunpack.c.l.b16 %v357
      %v364 = vunpack.c.l.b16 %v358
      %v365 = vunpack.c.h.b16 %v356
      %v366 = vunpack.c.h.b16 %v357
      %v367 = vunpack.c.h.b16 %v358
      %v368 = vpack.c.b16 %v363, %v362
      %v369 = vpack.c.b16 %v364, %v364
      %v370 = vpack.c.b16 %v366, %v365
      %v371 = vpack.c.b16 %v367, %v367
      %376 = vst [vmem:[#allocation8] sm:$0xff] %v368
      %377 = vst [vmem:[#allocation8 + $0x8] sm:$0xf] %v369
      %378 = vst [vmem:[#allocation8 + $0xc] sm:$0xff] %v370
      %379 = vst [vmem:[#allocation8 + $0x14] sm:$0xf] %v371
    $region29: #{tpu_custom_call.1} parent=1 // pred_fallthru
      _
    // Predicated region
    $region30: #{tpu_custom_call.1} parent=1 // pred_check
      _
    $region31: #{tpu_custom_call.1} parent=1 // pred_check_branch
      %381 = sbr.rel (0) target = $region33
    $region32: #{tpu_custom_call.1} parent=1 // pred_region
      %s383 = ssub.s32 384, 384
      %384 = vsyncadd [#allocation5], %s383
      %s385 = sshll.u32 [#allocation8], 4
      %s386 = int_to_ptr.vmem [resolvable:$true] %s385
      %391 = dma.vmem_to_hbm [thread:$0]  %s386, 384, %s3, [#allocation5], 192, 192, 12
    $region33: #{tpu_custom_call.1} parent=1 // pred_fallthru
      _
    // Predicated region
    $region34: #{tpu_custom_call.1} parent=1 // pred_check
      _
    $region35: #{tpu_custom_call.1} parent=1 // pred_check_branch
      %393 = sbr.rel (0) target = $region37
    $region36: #{tpu_custom_call.1} parent=1 // pred_region
      %394 = dma.done [#allocation5], 384
    $region37: #{tpu_custom_call.1} parent=1 // pred_fallthru
      _
    %395 = vsyncpa [#allocation4], 1
    %396 = vsyncpa [#allocation7], 1
    %397 = vsyncpa [#allocation5], 1

</llo_original>
